<compile_context>
chip_gen: v5e
topology: v5e:2x2
jax: 0.10.0
libtpu: 0.0.40
codegen_flags: <defaults>
</compile_context>

<pallas_src>
import functools

import jax
import jax.numpy as jnp
from jax.experimental import pallas as pl
from jax.experimental.pallas import tpu as pltpu

_LANE = 128  # TPU vreg lane width; every feature dim of this model fits in one tile.


def _cdiv(a, b):
    return -(-a // b)


def _round_up(n, m):
    return _cdiv(n, m) * m


def _pad2d(a, rows, cols):
    """Zero-pad a 2-D array up to (rows, cols)."""
    out = jnp.zeros((rows, cols), a.dtype)
    return out.at[: a.shape[0], : a.shape[1]].set(a)


def _autoencoder_kernel(x_ref, w_ref, b_ref, out_ref):
    """x_ref: (TB, in_dim) natural-width batch tile.
    w_ref: (128, 512) packed (in, out) weights; layer l lives in columns
           [l*128, (l+1)*128), zero-padded -> lane-dense intermediates are exact.
    b_ref: (1, 512) f32 packed biases.  out_ref: (TB, in_dim)."""
    f = w_ref.shape[0]           # 128-lane slot per layer
    in_dim = x_ref.shape[-1]     # natural (unpadded) feature width
    cdt = w_ref.dtype            # compute dtype fed to the MXU (bf16 or f32)

    def layer(inp, idx, rows, cols, relu):
        # Static, lane-aligned slices of the resident VMEM slabs; the MXU is fed
        # straight from VMEM (no full-slab materialization -> no vreg spills).
        w = w_ref[0:rows, idx * f: idx * f + cols]
        y = jnp.dot(inp, w, preferred_element_type=jnp.float32)
        y = y + b_ref[:, idx * f: idx * f + cols]
        return jnp.maximum(y, 0.0) if relu else y

    x = x_ref[...].astype(cdt)
    # Layer 0 contracts over the natural in_dim; later layers use the full
    # 128-lane intermediate (padded weight rows are zero, so results are exact).
    h = layer(x, 0, in_dim, f, True)                 # Linear(in_dim, 16) + ReLU
    z = layer(h.astype(cdt), 1, f, f, True)          # Linear(16, enc)    + ReLU
    d = layer(z.astype(cdt), 2, f, f, True)          # Linear(enc, 16)    + ReLU
    y = layer(d.astype(cdt), 3, f, in_dim, False)    # Linear(16, in_dim)
    out_ref[...] = y.astype(out_ref.dtype)


def pack_params(params, compute_dtype=jnp.bfloat16):
    """One-time packing (hoisted out of the forward path): four (in, out) weight
    matrices -> one lane-dense (128, 512) slab in compute_dtype; four (1, out)
    biases -> one f32 (1, 512) slab.  On v7x, compute_dtype could even be an
    fp8 type (bf16+fp8 MXU) for another 2x on streamed weight/x bytes."""
    ws = [params["w1"], params["w2"], params["w3"], params["w4"]]
    bs = [params["b1"], params["b2"], params["b3"], params["b4"]]
    f = _LANE
    for w in ws:
        assert w.shape[0] <= f and w.shape[1] <= f, "feature dims must fit one lane tile"
    w_slab = jnp.concatenate(
        [_pad2d(w.astype(compute_dtype), f, f) for w in ws], axis=1)
    b_slab = jnp.concatenate(
        [_pad2d(b.astype(jnp.float32), 1, f) for b in bs], axis=1)
    return w_slab, b_slab


@functools.partial(jax.jit, static_argnames=("block_batch",))
def autoencoder_forward(x, w_slab, b_slab, *, block_batch=4096):
    """x: (batch, input_dim); (w_slab, b_slab) from pack_params()."""
    batch, in_dim = x.shape
    f = _LANE
    compute_dtype = w_slab.dtype
    itemsize = jnp.dtype(compute_dtype).itemsize
    out_itemsize = jnp.dtype(x.dtype).itemsize
    sub = 8 * max(1, 4 // itemsize)      # sublane packing: 8 (f32) / 16 (bf16) / 32 (fp8)

    # Batch tiling: big tiles to amortize the ~0.35us per-grid-step overhead,
    # but keep >=2 (>=4) steps on large batches so the "parallel" axis can
    # shard across v7x's two TensorCores.
    if batch >= 8192:
        min_steps = 4
    elif batch >= 2048:
        min_steps = 2
    else:
        min_steps = 1
    n_steps = max(min_steps, _cdiv(batch, block_batch))
    tb = _round_up(max(1, _cdiv(batch, n_steps)), sub)
    batch_p = _round_up(batch, tb)
    grid = (batch_p // tb,)

    x_in = x.astype(compute_dtype)
    if batch_p != batch:
        x_in = jnp.zeros((batch_p, in_dim), compute_dtype).at[:batch].set(x_in)

    # Advisory cost: MXU work the kernel actually issues + natural-width streaming.
    flops = 2 * batch_p * (2 * in_dim * f + 2 * f * f)
    bytes_accessed = int(batch_p * in_dim * (itemsize + out_itemsize)
                         + w_slab.size * itemsize
                         + b_slab.size * jnp.dtype(b_slab.dtype).itemsize)
    cost = pl.CostEstimate(flops=flops, transcendentals=0,
                           bytes_accessed=bytes_accessed)

    # Raise the scoped-VMEM limit only when the tile actually needs more than
    # v5e's 16 MiB default (double-buffered x/out tiles + resident slabs +
    # live f32 intermediates); capped below v7x's 64 MiB physical VMEM.
    vmem_need = (2 * tb * in_dim * (itemsize + out_itemsize)
                 + 2 * w_slab.size * itemsize + b_slab.size * 4
                 + 6 * tb * f * 4)
    cp_kwargs = dict(dimension_semantics=("parallel",))
    if vmem_need > 16 * 1024 * 1024:
        cp_kwargs["vmem_limit_bytes"] = int(min(max(2 * vmem_need, 32 * 1024 * 1024),
                                                64 * 1024 * 1024))

    out_p = pl.pallas_call(
        _autoencoder_kernel,
        out_shape=jax.ShapeDtypeStruct((batch_p, in_dim), x.dtype),
        grid=grid,
        in_specs=[
            pl.BlockSpec((tb, in_dim), lambda i: (i, 0)),   # streamed batch tile of x
            pl.BlockSpec((f, 4 * f), lambda i: (0, 0)),     # weights: VMEM-resident
            pl.BlockSpec((1, 4 * f), lambda i: (0, 0)),     # biases:  VMEM-resident
        ],
        out_specs=pl.BlockSpec((tb, in_dim), lambda i: (i, 0)),
        compiler_params=pltpu.CompilerParams(**cp_kwargs),
        cost_estimate=cost,
    )(x_in, w_slab, b_slab)

    return out_p if batch_p == batch else out_p[:batch]


def init_params(key, input_dim=10, encoding_dim=5, hidden=16):
    """PyTorch-style Linear init: U(-1/sqrt(fan_in), 1/sqrt(fan_in)).
    Weights stored transposed as (in, out) so the hot path is y = x @ W + b."""
    def linear(k, fan_in, fan_out):
        kw, kb = jax.random.split(k)
        bound = 1.0 / jnp.sqrt(float(fan_in))
        w = jax.random.uniform(kw, (fan_in, fan_out), jnp.float32, -bound, bound)
        b = jax.random.uniform(kb, (1, fan_out), jnp.float32, -bound, bound)
        return w, b

    k1, k2, k3, k4 = jax.random.split(key, 4)
    w1, b1 = linear(k1, input_dim, hidden)        # encoder Linear(input_dim, 16)
    w2, b2 = linear(k2, hidden, encoding_dim)     # encoder Linear(16, encoding_dim)
    w3, b3 = linear(k3, encoding_dim, hidden)     # decoder Linear(encoding_dim, 16)
    w4, b4 = linear(k4, hidden, input_dim)        # decoder Linear(16, input_dim)
    return {"w1": w1, "b1": b1, "w2": w2, "b2": b2,
            "w3": w3, "b3": b3, "w4": w4, "b4": b4}


def _reference_forward(x, p):
    relu = lambda v: jnp.maximum(v, 0.0)
    h = relu(x @ p["w1"] + p["b1"])
    z = relu(h @ p["w2"] + p["b2"])
    d = relu(z @ p["w3"] + p["b3"])
    return d @ p["w4"] + p["b4"]


if __name__ == "__main__":
    key = jax.random.PRNGKey(0)
    kx, kp = jax.random.split(key)

    batch, input_dim, encoding_dim = 8, 10, 5
    x = jax.random.normal(kx, (batch, input_dim), jnp.float32)
    params = init_params(kp, input_dim=input_dim, encoding_dim=encoding_dim)
    ref = _reference_forward(x, params)

    # Exactness check: f32 streaming/compute path.
    w32, b32 = pack_params(params, compute_dtype=jnp.float32)
    out_f32 = jax.block_until_ready(autoencoder_forward(x, w32, b32))
    assert out_f32.shape == (batch, input_dim)
    assert jnp.allclose(out_f32, ref, atol=1e-5, rtol=1e-5)

    # Default fast path: bf16 streaming/compute with f32 accumulation -> looser
    # tolerance (expected precision change, not a bug).
    w_bf, b_bf = pack_params(params)              # bf16 default
    out_bf = jax.block_until_ready(autoencoder_forward(x, w_bf, b_bf))
    assert out_bf.shape == (batch, input_dim)
    assert jnp.allclose(out_bf, ref, atol=1e-1, rtol=1e-1)

    print("KERNEL_OK")
</pallas_src>

<mosaic_0001>
module attributes {stable_mosaic.version = 11 : i64} {
  func.func @_autoencoder_kernel(%arg0: i32, %arg1: memref<8x10xf32, #tpu.memory_space<vmem>>, %arg2: memref<128x512xf32, #tpu.memory_space<vmem>>, %arg3: memref<1x512xf32, #tpu.memory_space<vmem>>, %arg4: memref<8x10xf32, #tpu.memory_space<vmem>>) attributes {dimension_semantics = [#tpu.dimension_semantics<parallel>], iteration_bounds = array<i64: 1>, scalar_prefetch = 0 : i64, scratch_operands = 0 : i64, tpu.core_type = #tpu.core_type<tc>, window_params = [{transform_indices = @transform_0, window_bounds = array<i64: 8, 10>}, {pipeline_mode = #tpu.pipeline_mode<synchronous>, transform_indices = @transform_1, window_bounds = array<i64: 128, 512>}, {pipeline_mode = #tpu.pipeline_mode<synchronous>, transform_indices = @transform_2, window_bounds = array<i64: 1, 512>}, {transform_indices = @transform_3, window_bounds = array<i64: 8, 10>}]} {
    %c0 = arith.constant 0 : index
    %c0_0 = arith.constant 0 : index
    %0 = vector.load %arg1[%c0, %c0_0] : memref<8x10xf32, #tpu.memory_space<vmem>>, vector<8x10xf32>
    %c0_1 = arith.constant 0 : index
    %c0_2 = arith.constant 0 : index
    %1 = vector.load %arg2[%c0_1, %c0_2] : memref<128x512xf32, #tpu.memory_space<vmem>>, vector<10x128xf32>
    %cst = arith.constant dense<0.000000e+00> : vector<8x128xf32>
    %2 = tpu.matmul %0, %1, %cst {dimension_numbers = #tpu.dot_dimension_numbers<[1], [0], [0], [1], [0, 0, 1, 1], [], []>} : vector<8x10xf32>, vector<10x128xf32>, vector<8x128xf32> -> vector<8x128xf32>
    %c0_3 = arith.constant 0 : index
    %c0_4 = arith.constant 0 : index
    %3 = vector.load %arg3[%c0_3, %c0_4] : memref<1x512xf32, #tpu.memory_space<vmem>>, vector<1x128xf32>
    %4 = vector.broadcast %3 : vector<1x128xf32> to vector<8x128xf32>
    %5 = arith.addf %2, %4 : vector<8x128xf32>
    %cst_5 = arith.constant 0.000000e+00 : f32
    %6 = vector.broadcast %cst_5 : f32 to vector<8x128xf32>
    %7 = arith.maximumf %5, %6 : vector<8x128xf32>
    %c0_6 = arith.constant 0 : index
    %c128 = arith.constant 128 : index
    %8 = vector.load %arg2[%c0_6, %c128] : memref<128x512xf32, #tpu.memory_space<vmem>>, vector<128x128xf32>
    %cst_7 = arith.constant dense<0.000000e+00> : vector<8x128xf32>
    %9 = tpu.matmul %7, %8, %cst_7 {dimension_numbers = #tpu.dot_dimension_numbers<[1], [0], [0], [1], [0, 0, 1, 1], [], []>} : vector<8x128xf32>, vector<128x128xf32>, vector<8x128xf32> -> vector<8x128xf32>
    %c0_8 = arith.constant 0 : index
    %c128_9 = arith.constant 128 : index
    %10 = vector.load %arg3[%c0_8, %c128_9] : memref<1x512xf32, #tpu.memory_space<vmem>>, vector<1x128xf32>
    %11 = vector.broadcast %10 : vector<1x128xf32> to vector<8x128xf32>
    %12 = arith.addf %9, %11 : vector<8x128xf32>
    %cst_10 = arith.constant 0.000000e+00 : f32
    %13 = vector.broadcast %cst_10 : f32 to vector<8x128xf32>
    %14 = arith.maximumf %12, %13 : vector<8x128xf32>
    %c0_11 = arith.constant 0 : index
    %c256 = arith.constant 256 : index
    %15 = vector.load %arg2[%c0_11, %c256] : memref<128x512xf32, #tpu.memory_space<vmem>>, vector<128x128xf32>
    %cst_12 = arith.constant dense<0.000000e+00> : vector<8x128xf32>
    %16 = tpu.matmul %14, %15, %cst_12 {dimension_numbers = #tpu.dot_dimension_numbers<[1], [0], [0], [1], [0, 0, 1, 1], [], []>} : vector<8x128xf32>, vector<128x128xf32>, vector<8x128xf32> -> vector<8x128xf32>
    %c0_13 = arith.constant 0 : index
    %c256_14 = arith.constant 256 : index
    %17 = vector.load %arg3[%c0_13, %c256_14] : memref<1x512xf32, #tpu.memory_space<vmem>>, vector<1x128xf32>
    %18 = vector.broadcast %17 : vector<1x128xf32> to vector<8x128xf32>
    %19 = arith.addf %16, %18 : vector<8x128xf32>
    %cst_15 = arith.constant 0.000000e+00 : f32
    %20 = vector.broadcast %cst_15 : f32 to vector<8x128xf32>
    %21 = arith.maximumf %19, %20 : vector<8x128xf32>
    %c0_16 = arith.constant 0 : index
    %c384 = arith.constant 384 : index
    %22 = vector.load %arg2[%c0_16, %c384] : memref<128x512xf32, #tpu.memory_space<vmem>>, vector<128x10xf32>
    %cst_17 = arith.constant dense<0.000000e+00> : vector<8x10xf32>
    %23 = tpu.matmul %21, %22, %cst_17 {dimension_numbers = #tpu.dot_dimension_numbers<[1], [0], [0], [1], [0, 0, 1, 1], [], []>} : vector<8x128xf32>, vector<128x10xf32>, vector<8x10xf32> -> vector<8x10xf32>
    %c0_18 = arith.constant 0 : index
    %c384_19 = arith.constant 384 : index
    %24 = vector.load %arg3[%c0_18, %c384_19] : memref<1x512xf32, #tpu.memory_space<vmem>>, vector<1x10xf32>
    %25 = vector.broadcast %24 : vector<1x10xf32> to vector<8x10xf32>
    %26 = arith.addf %23, %25 : vector<8x10xf32>
    %c0_20 = arith.constant 0 : index
    %c0_21 = arith.constant 0 : index
    %27 = vector.load %arg4[%c0_20, %c0_21] : memref<8x10xf32, #tpu.memory_space<vmem>>, vector<8x10xf32>
    tpu.vector_store %arg4[%c0_20, %c0_21], %26 {strides = array<i32>} : memref<8x10xf32, #tpu.memory_space<vmem>>, vector<8x10xf32>,
    return
  }
  func.func @transform_0(%arg0: i32) -> (i32, i32) {
    %c0_i32 = arith.constant 0 : i32
    %c0_i32_0 = arith.constant 0 : i32
    return %arg0, %c0_i32 : i32, i32
  }
  func.func @transform_1(%arg0: i32) -> (i32, i32) {
    %c0_i32 = arith.constant 0 : i32
    %c0_i32_0 = arith.constant 0 : i32
    %c0_i32_1 = arith.constant 0 : i32
    return %c0_i32, %c0_i32_0 : i32, i32
  }
  func.func @transform_2(%arg0: i32) -> (i32, i32) {
    %c0_i32 = arith.constant 0 : i32
    %c0_i32_0 = arith.constant 0 : i32
    %c0_i32_1 = arith.constant 0 : i32
    return %c0_i32, %c0_i32_0 : i32, i32
  }
  func.func @transform_3(%arg0: i32) -> (i32, i32) {
    %c0_i32 = arith.constant 0 : i32
    %c0_i32_0 = arith.constant 0 : i32
    return %arg0, %c0_i32 : i32, i32
  }
}

</mosaic_0001>

<llo_original>
// kernel: autoencoder_forward.1
$region0: #{autoencoder_forward.1}
  #allocation0 [shape = 'u32[]', space=smem, size = 0x4, offset = 0x4, fixed_abs, tag = 'smem constant byte address 0x4 - core index']
  #allocation1 [shape = 'u32[72,128]{1,0:T(1,128)}', space=vmem, size = 0x9000, scoped, tag = 'internal scratch']
  %s0 = inlined_call_operand.hbm [shape: f32[8,10], index: 0, kind: input, shape index: {}]
  %s1 = inlined_call_operand.hbm [shape: f32[128,512], index: 1, kind: input, shape index: {}]
  %s2 = inlined_call_operand.hbm [shape: f32[1,512], index: 2, kind: input, shape index: {}]
  %s3 = inlined_call_operand.hbm [shape: f32[8,10], index: 3, kind: output, shape index: {}]
  %s4 = sld [smem:[#allocation0]]
  $region34: #{autoencoder_forward.1} parent=0
    _
  %s6 = ssub.s32 1, %s4
  %s7 = scalar_select 0, %s6, %s4
  $region1: #{autoencoder_forward.1} parent=0
    #allocation2 [shape = 'u8[4096]{0}', space=vmem, size = 0x1000, scoped, tag = 'input window, operand 0, single buffered']
    #allocation3 [shape = 's32[1]{0}', space=sflag, size = 0x4, scoped, tag = 'scoped memory for autoencoder_forward.1']
    #allocation4 [shape = 's32[1]{0}', space=sflag, size = 0x4, scoped, tag = 'scoped memory for autoencoder_forward.1']
    #allocation5 [shape = 'u8[262144]{0}', space=vmem, size = 0x40000, scoped, tag = 'input window, operand 1, single buffered']
    #allocation6 [shape = 's32[1]{0}', space=sflag, size = 0x4, scoped, tag = 'scoped memory for autoencoder_forward.1']
    #allocation7 [shape = 'u8[2048]{0}', space=vmem, size = 0x800, scoped, tag = 'input window, operand 2, single buffered']
    #allocation8 [shape = 'u8[4096]{0}', space=vmem, size = 0x1000, scoped, tag = 'output window, operand 0, single buffered']
    %8 = vsyncpa [#allocation3], 0
    %9 = vsyncpa [#allocation6], 0
    %10 = vsyncpa [#allocation4], 0
    // Predicated region
    $region2: #{autoencoder_forward.1} parent=1 // pred_check
      _
    $region3: #{autoencoder_forward.1} parent=1 // pred_check_branch
      %12 = sbr.rel (0) target = $region5
    $region4: #{autoencoder_forward.1} parent=1 // pred_region
      %14 = vsyncadd [#allocation3], 0
      %s16 = sshll.u32 %s0, 4
      %s17 = int_to_ptr.hbm [resolvable:$true] %s16
      %s18 = sshll.u32 [#allocation2], 4
      %s19 = int_to_ptr.vmem [resolvable:$true] %s18
      %21 = dma.hbm_to_vmem [thread:$0]  %s17, 128, %s19, [#allocation3]
    $region5: #{autoencoder_forward.1} parent=1 // pred_fallthru
      _
    // Predicated region
    $region6: #{autoencoder_forward.1} parent=1 // pred_check
      _
    $region7: #{autoencoder_forward.1} parent=1 // pred_check_branch
      %23 = sbr.rel (0) target = $region9
    $region8: #{autoencoder_forward.1} parent=1 // pred_region
      %25 = vsyncadd [#allocation6], 0
      %s26 = sshll.u32 %s1, 4
      %s27 = int_to_ptr.hbm [resolvable:$true] %s26
      %s28 = sshll.u32 [#allocation5], 4
      %s29 = int_to_ptr.vmem [resolvable:$true] %s28
      %34 = dma.hbm_to_vmem [thread:$0]  %s27, 8192, %s29, [#allocation6], 512, 512, 32
    $region9: #{autoencoder_forward.1} parent=1 // pred_fallthru
      _
    // Predicated region
    $region10: #{autoencoder_forward.1} parent=1 // pred_check
      _
    $region11: #{autoencoder_forward.1} parent=1 // pred_check_branch
      %36 = sbr.rel (0) target = $region13
    $region12: #{autoencoder_forward.1} parent=1 // pred_region
      %38 = vsyncadd [#allocation6], 0
      %s40 = sshll.u32 %s2, 4
      %s41 = int_to_ptr.hbm [resolvable:$true] %s40
      %s42 = sshll.u32 [#allocation7], 4
      %s43 = int_to_ptr.vmem [resolvable:$true] %s42
      %45 = dma.hbm_to_vmem [thread:$0]  %s41, 64, %s43, [#allocation6]
    $region13: #{autoencoder_forward.1} parent=1 // pred_fallthru
      _
    // Predicated region
    $region14: #{autoencoder_forward.1} parent=1 // pred_check
      _
    $region15: #{autoencoder_forward.1} parent=1 // pred_check_branch
      %47 = sbr.rel (0) target = $region17
    $region16: #{autoencoder_forward.1} parent=1 // pred_region
      %49 = dma.done [#allocation3], 128
    $region17: #{autoencoder_forward.1} parent=1 // pred_fallthru
      _
    // Predicated region
    $region18: #{autoencoder_forward.1} parent=1 // pred_check
      _
    $region19: #{autoencoder_forward.1} parent=1 // pred_check_branch
      %51 = sbr.rel (0) target = $region21
    $region20: #{autoencoder_forward.1} parent=1 // pred_region
      %53 = dma.done [#allocation6], 8192
    $region21: #{autoencoder_forward.1} parent=1 // pred_fallthru
      _
    // Predicated region
    $region22: #{autoencoder_forward.1} parent=1 // pred_check
      _
    $region23: #{autoencoder_forward.1} parent=1 // pred_check_branch
      %55 = sbr.rel (0) target = $region25
    $region24: #{autoencoder_forward.1} parent=1 // pred_region
      %57 = dma.done [#allocation6], 64
    $region25: #{autoencoder_forward.1} parent=1 // pred_fallthru
      _
    %v58 = vld [vmem:[#allocation2] sm:$0xff]
    %v59 = vld [vmem:[#allocation5] sm:$0xff]
    %v60 = vld [vmem:[#allocation5 + $0x20] sm:$0x3]
    %v61 = vld [vmem:[#allocation7] sm:$0x1]
    %v63 = vperm.slane %v61, 0
    %vm65 = vcmask 80896
    %v67 = vsel %vm65, %v58, 0
    %vm69 = vcmask 1041408
    %v71 = vsel %vm69, %v60, 0
    %73 = vmatpush.msra.mxu0 0.0
    %74 = vmatpush.msra.mxu0 0.0
    %75 = vmatpush.msra.mxu0 0.0
    %76 = vmatpush.msra.mxu0 0.0
    %77 = vmatpush.msra.mxu0 0.0
    %78 = vmatpush.msra.mxu0 0.0
    %79 = vmatpush.msra.mxu0 0.0
    %80 = vmatpush.msra.mxu0 0.0
    %81 = vmatpush.msra.mxu0 0.0
    %82 = vmatpush.msra.mxu0 0.0
    %83 = vmatpush.msra.mxu0 0.0
    %84 = vmatpush.msra.mxu0 0.0
    %85 = vmatpush.msra.mxu0 0.0
    %86 = vmatpush.msra.mxu0 0.0
    %87 = vmatpush.msra.mxu0 %v71
    %88 = vmatpush.msra.mxu0 %v59
    %89 = vmatmul.f32.gmra.mxu0 %v67
    %v90 = vpop.f32.mrf.mxu0
    %v91 = vadd.f32 %v63, %v90
    %92 = vdwg.mxu0
    %v93 = vmax.f32 %v91, 0.0
    %v94 = vld [vmem:[#allocation5 + $0x8] sm:$0xff]
    %v95 = vld [vmem:[#allocation5 + $0x28] sm:$0xff]
    %v96 = vld [vmem:[#allocation5 + $0x48] sm:$0xff]
    %v97 = vld [vmem:[#allocation5 + $0x68] sm:$0xff]
    %v98 = vld [vmem:[#allocation5 + $0x88] sm:$0xff]
    %v99 = vld [vmem:[#allocation5 + $0xa8] sm:$0xff]
    %v100 = vld [vmem:[#allocation5 + $0xc8] sm:$0xff]
    %v101 = vld [vmem:[#allocation5 + $0xe8] sm:$0xff]
    %v102 = vld [vmem:[#allocation5 + $0x108] sm:$0xff]
    %v103 = vld [vmem:[#allocation5 + $0x128] sm:$0xff]
    %v104 = vld [vmem:[#allocation5 + $0x148] sm:$0xff]
    %v105 = vld [vmem:[#allocation5 + $0x168] sm:$0xff]
    %v106 = vld [vmem:[#allocation5 + $0x188] sm:$0xff]
    %v107 = vld [vmem:[#allocation5 + $0x1a8] sm:$0xff]
    %v108 = vld [vmem:[#allocation5 + $0x1c8] sm:$0xff]
    %v109 = vld [vmem:[#allocation5 + $0x1e8] sm:$0xff]
    %v110 = vld [vmem:[#allocation7 + $0x1] sm:$0x1]
    %v112 = vperm.slane %v110, 0
    %114 = vmatpush.msra.mxu0 %v109
    %115 = vmatpush.msra.mxu0 %v108
    %116 = vmatpush.msra.mxu0 %v107
    %117 = vmatpush.msra.mxu0 %v106
    %118 = vmatpush.msra.mxu0 %v105
    %119 = vmatpush.msra.mxu0 %v104
    %120 = vmatpush.msra.mxu0 %v103
    %121 = vmatpush.msra.mxu0 %v102
    %122 = vmatpush.msra.mxu0 %v101
    %123 = vmatpush.msra.mxu0 %v100
    %124 = vmatpush.msra.mxu0 %v99
    %125 = vmatpush.msra.mxu0 %v98
    %126 = vmatpush.msra.mxu0 %v97
    %127 = vmatpush.msra.mxu0 %v96
    %128 = vmatpush.msra.mxu0 %v95
    %129 = vmatpush.msra.mxu0 %v94
    %130 = vmatmul.f32.gmra.mxu0 %v93
    %v131 = vpop.f32.mrf.mxu0
    %v132 = vadd.f32 %v112, %v131
    %133 = vdwg.mxu0
    %v134 = vmax.f32 %v132, 0.0
    %v135 = vld [vmem:[#allocation5 + $0x10] sm:$0xff]
    %v136 = vld [vmem:[#allocation5 + $0x30] sm:$0xff]
    %v137 = vld [vmem:[#allocation5 + $0x50] sm:$0xff]
    %v138 = vld [vmem:[#allocation5 + $0x70] sm:$0xff]
    %v139 = vld [vmem:[#allocation5 + $0x90] sm:$0xff]
    %v140 = vld [vmem:[#allocation5 + $0xb0] sm:$0xff]
    %v141 = vld [vmem:[#allocation5 + $0xd0] sm:$0xff]
    %v142 = vld [vmem:[#allocation5 + $0xf0] sm:$0xff]
    %v143 = vld [vmem:[#allocation5 + $0x110] sm:$0xff]
    %v144 = vld [vmem:[#allocation5 + $0x130] sm:$0xff]
    %v145 = vld [vmem:[#allocation5 + $0x150] sm:$0xff]
    %v146 = vld [vmem:[#allocation5 + $0x170] sm:$0xff]
    %v147 = vld [vmem:[#allocation5 + $0x190] sm:$0xff]
    %v148 = vld [vmem:[#allocation5 + $0x1b0] sm:$0xff]
    %v149 = vld [vmem:[#allocation5 + $0x1d0] sm:$0xff]
    %v150 = vld [vmem:[#allocation5 + $0x1f0] sm:$0xff]
    %v151 = vld [vmem:[#allocation7 + $0x2] sm:$0x1]
    %v153 = vperm.slane %v151, 0
    %155 = vmatpush.msra.mxu0 %v150
    %156 = vmatpush.msra.mxu0 %v149
    %157 = vmatpush.msra.mxu0 %v148
    %158 = vmatpush.msra.mxu0 %v147
    %159 = vmatpush.msra.mxu0 %v146
    %160 = vmatpush.msra.mxu0 %v145
    %161 = vmatpush.msra.mxu0 %v144
    %162 = vmatpush.msra.mxu0 %v143
    %163 = vmatpush.msra.mxu0 %v142
    %164 = vmatpush.msra.mxu0 %v141
    %165 = vmatpush.msra.mxu0 %v140
    %166 = vmatpush.msra.mxu0 %v139
    %167 = vmatpush.msra.mxu0 %v138
    %168 = vmatpush.msra.mxu0 %v137
    %169 = vmatpush.msra.mxu0 %v136
    %170 = vmatpush.msra.mxu0 %v135
    %171 = vmatmul.f32.gmra.mxu0 %v134
    %v172 = vpop.f32.mrf.mxu0
    %v173 = vadd.f32 %v153, %v172
    %174 = vdwg.mxu0
    %v175 = vmax.f32 %v173, 0.0
    %v176 = vld [vmem:[#allocation5 + $0x18] sm:$0xff]
    %v177 = vld [vmem:[#allocation5 + $0x38] sm:$0xff]
    %v178 = vld [vmem:[#allocation5 + $0x58] sm:$0xff]
    %v179 = vld [vmem:[#allocation5 + $0x78] sm:$0xff]
    %v180 = vld [vmem:[#allocation5 + $0x98] sm:$0xff]
    %v181 = vld [vmem:[#allocation5 + $0xb8] sm:$0xff]
    %v182 = vld [vmem:[#allocation5 + $0xd8] sm:$0xff]
    %v183 = vld [vmem:[#allocation5 + $0xf8] sm:$0xff]
    %v184 = vld [vmem:[#allocation5 + $0x118] sm:$0xff]
    %v185 = vld [vmem:[#allocation5 + $0x138] sm:$0xff]
    %v186 = vld [vmem:[#allocation5 + $0x158] sm:$0xff]
    %v187 = vld [vmem:[#allocation5 + $0x178] sm:$0xff]
    %v188 = vld [vmem:[#allocation5 + $0x198] sm:$0xff]
    %v189 = vld [vmem:[#allocation5 + $0x1b8] sm:$0xff]
    %v190 = vld [vmem:[#allocation5 + $0x1d8] sm:$0xff]
    %v191 = vld [vmem:[#allocation5 + $0x1f8] sm:$0xff]
    %v192 = vld [vmem:[#allocation7 + $0x3] sm:$0x1]
    %v194 = vperm.slane %v192, 0
    %196 = vmatpush.msra.mxu0 %v191
    %197 = vmatpush.msra.mxu0 %v190
    %198 = vmatpush.msra.mxu0 %v189
    %199 = vmatpush.msra.mxu0 %v188
    %200 = vmatpush.msra.mxu0 %v187
    %201 = vmatpush.msra.mxu0 %v186
    %202 = vmatpush.msra.mxu0 %v185
    %203 = vmatpush.msra.mxu0 %v184
    %204 = vmatpush.msra.mxu0 %v183
    %205 = vmatpush.msra.mxu0 %v182
    %206 = vmatpush.msra.mxu0 %v181
    %207 = vmatpush.msra.mxu0 %v180
    %208 = vmatpush.msra.mxu0 %v179
    %209 = vmatpush.msra.mxu0 %v178
    %210 = vmatpush.msra.mxu0 %v177
    %211 = vmatpush.msra.mxu0 %v176
    %212 = vmatmul.f32.gmra.mxu0 %v175
    %v213 = vpop.f32.mrf.mxu0
    %v214 = vadd.f32 %v194, %v213
    %215 = vdwg.mxu0
    %216 = vst.msk [vmem:[#allocation8] sm:$0xff] %vm65, %v214
    // Predicated region
    $region26: #{autoencoder_forward.1} parent=1 // pred_check
      _
    $region27: #{autoencoder_forward.1} parent=1 // pred_check_branch
      %218 = sbr.rel (0) target = $region29
    $region28: #{autoencoder_forward.1} parent=1 // pred_region
      %220 = vsyncadd [#allocation4], 0
      %s222 = sshll.u32 [#allocation8], 4
      %s223 = int_to_ptr.vmem [resolvable:$true] %s222
      %s224 = sshll.u32 %s3, 4
      %s225 = int_to_ptr.hbm [resolvable:$true] %s224
      %227 = dma.vmem_to_hbm [thread:$0]  %s223, 128, %s225, [#allocation4]
    $region29: #{autoencoder_forward.1} parent=1 // pred_fallthru
      _
    // Predicated region
    $region30: #{autoencoder_forward.1} parent=1 // pred_check
      _
    $region31: #{autoencoder_forward.1} parent=1 // pred_check_branch
      %229 = sbr.rel (0) target = $region33
    $region32: #{autoencoder_forward.1} parent=1 // pred_region
      %231 = dma.done [#allocation4], 128
    $region33: #{autoencoder_forward.1} parent=1 // pred_fallthru
      _
    %232 = vsyncpa [#allocation3], 1
    %233 = vsyncpa [#allocation6], 1
    %234 = vsyncpa [#allocation4], 1

</llo_original>
